<compile_context>
chip_gen: v7x
topology: tpu7x:2x2x1
jax: 0.10.0
libtpu: 0.0.40
codegen_flags: <defaults>
</compile_context>

<pallas_src>
import functools

import jax
import jax.numpy as jnp
from jax.experimental import pallas as pl
from jax.experimental.pallas import tpu as pltpu


def critic_kernel(x_ref, w1_ref, b1_ref, w2_ref, b2_ref, w3_ref, b3_ref, o_ref):
    """Fused MLP critic: two ReLU hidden layers (MXU) + VPU/XLU scalar head."""
    # x streams in as f32; cast to bf16 on the VPU right before the MXU
    # matmul (saves a separate wrapper-side cast pass over HBM).
    x = x_ref[...].astype(jnp.bfloat16)                           # (TM, D)
    h1 = jnp.dot(x, w1_ref[...], preferred_element_type=jnp.float32) + b1_ref[...]
    h1 = jnp.maximum(h1, 0.0).astype(jnp.bfloat16)                # (TM, 128)
    h2 = jnp.dot(h1, w2_ref[...], preferred_element_type=jnp.float32) + b2_ref[...]
    h2 = jnp.maximum(h2, 0.0)                                     # (TM, 512) f32
    # Scalar head on VPU + XLU instead of an N=1 MXU matmul:
    # (TM,512) * (1,512) -> lane-sum -> (TM,1)
    v = jnp.sum(h2 * w3_ref[...], axis=-1, keepdims=True) + b3_ref[...]
    o_ref[...] = v


def _round_up(v, m):
    return -(-v // m) * m


@functools.partial(jax.jit, static_argnames=("tm",))
def critic_forward(s, params, tm=1024):
    """s: (B, C, H, W) float32 -> value (B, 1) float32.

    `params` = (w1_bf16, b1_f32, w2_bf16, b2_f32, w3_row_f32, b3_f32)
    (weights already pre-cast to bf16 once, outside this function).
    """
    w1b, b1, w2b, b2, w3_row, b3 = params
    B = s.shape[0]
    D = w1b.shape[0]
    H1 = w1b.shape[1]
    H2 = w2b.shape[1]

    x = s.reshape(B, -1).astype(jnp.float32)      # torch: s.view(batch, -1)

    # Batch tile selection: biggest tile <= tm (multiple of 16), no explicit
    # padding (ragged last block handled by Pallas). If one tile would cover
    # the whole batch, split into >= 2 grid steps so v7x's second TensorCore
    # is used (harmless single extra ~0.35 us step on v5e/v6e).
    if B <= 32:
        TM = B                                  # block == full batch dim
    else:
        TM = min(tm, _round_up(B, 16))
        if -(-B // TM) == 1:
            TM = _round_up(-(-B // 2), 16)
    num_blocks = -(-B // TM)
    grid = (num_blocks,)

    flops = 2 * B * (D * H1 + H1 * H2 + H2)
    bytes_accessed = (
        B * D * 4                               # x (f32, read once)
        + D * H1 * 2 + H1 * H2 * 2              # bf16 weights (resident)
        + (H1 + 2 * H2 + 1) * 4                 # biases + head row
        + B * 4                                 # output
    )

    # Explicit VMEM budget: double-buffered x tiles + resident weights +
    # in-kernel intermediates + slack; stays under v7x's 64 MiB physical.
    vmem_bytes = (
        2 * TM * D * 4                          # double-buffered f32 x tiles
        + 2 * (D * H1 * 2 + H1 * H2 * 2)        # (double-buffered) bf16 weights
        + 2 * (H1 + 2 * H2 + 1) * 4             # biases / head row
        + 2 * TM * 4                            # output tiles
        + TM * (H1 * 2 + H2 * 8)                # h1 (bf16), h2 / products (f32)
    )
    vmem_limit = min(vmem_bytes + (8 << 20), 60 << 20)

    out = pl.pallas_call(
        critic_kernel,
        out_shape=jax.ShapeDtypeStruct((B, 1), jnp.float32),
        grid=grid,
        in_specs=[
            pl.BlockSpec((TM, D), lambda i: (i, 0)),    # x tile (streams over batch)
            pl.BlockSpec((D, H1), lambda i: (0, 0)),    # W1 resident (bf16)
            pl.BlockSpec((1, H1), lambda i: (0, 0)),    # b1 resident
            pl.BlockSpec((H1, H2), lambda i: (0, 0)),   # W2 resident (bf16)
            pl.BlockSpec((1, H2), lambda i: (0, 0)),    # b2 resident
            pl.BlockSpec((1, H2), lambda i: (0, 0)),    # W3 (row vector) resident
            pl.BlockSpec((1, 1), lambda i: (0, 0)),     # b3 resident
        ],
        out_specs=pl.BlockSpec((TM, 1), lambda i: (i, 0)),
        compiler_params=pltpu.CompilerParams(
            dimension_semantics=("parallel",),
            vmem_limit_bytes=int(vmem_limit),
        ),
        cost_estimate=pl.CostEstimate(
            flops=flops, transcendentals=0, bytes_accessed=bytes_accessed
        ),
    )(x, w1b, b1, w2b, b2, w3_row, b3)

    return out


def init_params(key, in_dim, h1=128, h2=512):
    """Deterministic synthetic f32 parameters (uniform, torch-default scale)."""
    ks = jax.random.split(key, 6)

    def lin(kw, kb, fan_in, fan_out):
        bound = 1.0 / jnp.sqrt(jnp.float32(fan_in))
        w = jax.random.uniform(kw, (fan_in, fan_out), jnp.float32, -bound, bound)
        b = jax.random.uniform(kb, (1, fan_out), jnp.float32, -bound, bound)
        return w, b

    w1, b1 = lin(ks[0], ks[1], in_dim, h1)
    w2, b2 = lin(ks[2], ks[3], h1, h2)
    w3, b3 = lin(ks[4], ks[5], h2, 1)           # Critic.last = nn.Linear(512, 1)
    w3_row = w3.reshape(1, h2)                  # row-vector layout for VPU head
    return (w1, b1, w2, b2, w3_row, b3)


def to_device_params(params):
    """Pre-cast the MXU weights to bf16 ONCE (outside the per-call wrapper)."""
    w1, b1, w2, b2, w3_row, b3 = params
    return (w1.astype(jnp.bfloat16), b1,
            w2.astype(jnp.bfloat16), b2,
            w3_row, b3)


def critic_reference(s, params, bf16_feed=True):
    """Pure-JAX reference of the same forward pass (matching operand dtypes)."""
    w1, b1, w2, b2, w3_row, b3 = params
    x = s.reshape(s.shape[0], -1).astype(jnp.float32)
    if bf16_feed:
        x = x.astype(jnp.bfloat16)
        w1 = w1.astype(jnp.bfloat16)
        w2 = w2.astype(jnp.bfloat16)
    h1 = jnp.maximum(
        jnp.dot(x, w1, preferred_element_type=jnp.float32) + b1, 0.0)
    if bf16_feed:
        h1 = h1.astype(jnp.bfloat16)
    h2 = jnp.maximum(
        jnp.dot(h1, w2, preferred_element_type=jnp.float32) + b2, 0.0)
    return jnp.sum(h2 * w3_row, axis=-1, keepdims=True) + b3


if __name__ == "__main__":
    key = jax.random.PRNGKey(0)
    k_obs, k_par = jax.random.split(key)

    B, C, H, W = 2, 4, 16, 16        # small NCHW observation batch
    in_dim = C * H * W               # 1024 flattened features

    s = jax.random.normal(k_obs, (B, C, H, W), jnp.float32)
    params_f32 = init_params(k_par, in_dim)
    params_dev = to_device_params(params_f32)   # bf16 weights, cast once

    out = critic_forward(s, params_dev)
    out = jax.block_until_ready(out)
    assert out.shape == (B, 1), out.shape

    # Bit-for-bit-style check against a reference fed the same bf16 operands.
    ref_bf16 = critic_reference(s, params_f32, bf16_feed=True)
    assert jnp.allclose(out, ref_bf16, atol=2e-3, rtol=2e-3), (
        "mismatch vs bf16-feed reference")

    # Loose sanity check against the full-f32 reference.
    ref_f32 = critic_reference(s, params_f32, bf16_feed=False)
    assert jnp.allclose(out, ref_f32, atol=5e-2, rtol=5e-2), (
        "mismatch vs f32 reference")

    print("KERNEL_OK")
</pallas_src>

<mosaic_0001>
module attributes {stable_mosaic.version = 11 : i64} {
  func.func @critic_kernel(%arg0: i32, %arg1: memref<2x1024xf32, #tpu.memory_space<vmem>>, %arg2: memref<1024x128xbf16, #tpu.memory_space<vmem>>, %arg3: memref<1x128xf32, #tpu.memory_space<vmem>>, %arg4: memref<128x512xbf16, #tpu.memory_space<vmem>>, %arg5: memref<1x512xf32, #tpu.memory_space<vmem>>, %arg6: memref<1x512xf32, #tpu.memory_space<vmem>>, %arg7: memref<1x1xf32, #tpu.memory_space<vmem>>, %arg8: memref<2x1xf32, #tpu.memory_space<vmem>>) attributes {dimension_semantics = [#tpu.dimension_semantics<parallel>], iteration_bounds = array<i64: 1>, scalar_prefetch = 0 : i64, scratch_operands = 0 : i64, tpu.core_type = #tpu.core_type<tc>, window_params = [{transform_indices = @transform_0, window_bounds = array<i64: 2, 1024>}, {pipeline_mode = #tpu.pipeline_mode<synchronous>, transform_indices = @transform_1, window_bounds = array<i64: 1024, 128>}, {pipeline_mode = #tpu.pipeline_mode<synchronous>, transform_indices = @transform_2, window_bounds = array<i64: 1, 128>}, {pipeline_mode = #tpu.pipeline_mode<synchronous>, transform_indices = @transform_3, window_bounds = array<i64: 128, 512>}, {pipeline_mode = #tpu.pipeline_mode<synchronous>, transform_indices = @transform_4, window_bounds = array<i64: 1, 512>}, {pipeline_mode = #tpu.pipeline_mode<synchronous>, transform_indices = @transform_5, window_bounds = array<i64: 1, 512>}, {pipeline_mode = #tpu.pipeline_mode<synchronous>, transform_indices = @transform_6, window_bounds = array<i64: 1, 1>}, {transform_indices = @transform_7, window_bounds = array<i64: 2, 1>}]} {
    %c0 = arith.constant 0 : index
    %c0_0 = arith.constant 0 : index
    %0 = vector.load %arg1[%c0, %c0_0] : memref<2x1024xf32, #tpu.memory_space<vmem>>, vector<2x1024xf32>
    %1 = arith.truncf %0 : vector<2x1024xf32> to vector<2x1024xbf16>
    %c0_1 = arith.constant 0 : index
    %c0_2 = arith.constant 0 : index
    %2 = vector.load %arg2[%c0_1, %c0_2] : memref<1024x128xbf16, #tpu.memory_space<vmem>>, vector<1024x128xbf16>
    %cst = arith.constant dense<0.000000e+00> : vector<2x128xf32>
    %3 = tpu.matmul %1, %2, %cst {dimension_numbers = #tpu.dot_dimension_numbers<[1], [0], [0], [1], [0, 0, 1, 1], [], []>} : vector<2x1024xbf16>, vector<1024x128xbf16>, vector<2x128xf32> -> vector<2x128xf32>
    %c0_3 = arith.constant 0 : index
    %c0_4 = arith.constant 0 : index
    %4 = vector.load %arg3[%c0_3, %c0_4] : memref<1x128xf32, #tpu.memory_space<vmem>>, vector<1x128xf32>
    %5 = vector.broadcast %4 : vector<1x128xf32> to vector<2x128xf32>
    %6 = arith.addf %3, %5 : vector<2x128xf32>
    %cst_5 = arith.constant 0.000000e+00 : f32
    %7 = vector.broadcast %cst_5 : f32 to vector<2x128xf32>
    %8 = arith.maximumf %6, %7 : vector<2x128xf32>
    %9 = arith.truncf %8 : vector<2x128xf32> to vector<2x128xbf16>
    %c0_6 = arith.constant 0 : index
    %c0_7 = arith.constant 0 : index
    %10 = vector.load %arg4[%c0_6, %c0_7] : memref<128x512xbf16, #tpu.memory_space<vmem>>, vector<128x512xbf16>
    %cst_8 = arith.constant dense<0.000000e+00> : vector<2x512xf32>
    %11 = tpu.matmul %9, %10, %cst_8 {dimension_numbers = #tpu.dot_dimension_numbers<[1], [0], [0], [1], [0, 0, 1, 1], [], []>} : vector<2x128xbf16>, vector<128x512xbf16>, vector<2x512xf32> -> vector<2x512xf32>
    %c0_9 = arith.constant 0 : index
    %c0_10 = arith.constant 0 : index
    %12 = vector.load %arg5[%c0_9, %c0_10] : memref<1x512xf32, #tpu.memory_space<vmem>>, vector<1x512xf32>
    %13 = vector.broadcast %12 : vector<1x512xf32> to vector<2x512xf32>
    %14 = arith.addf %11, %13 : vector<2x512xf32>
    %cst_11 = arith.constant 0.000000e+00 : f32
    %15 = vector.broadcast %cst_11 : f32 to vector<2x512xf32>
    %16 = arith.maximumf %14, %15 : vector<2x512xf32>
    %c0_12 = arith.constant 0 : index
    %c0_13 = arith.constant 0 : index
    %17 = vector.load %arg6[%c0_12, %c0_13] : memref<1x512xf32, #tpu.memory_space<vmem>>, vector<1x512xf32>
    %18 = vector.broadcast %17 : vector<1x512xf32> to vector<2x512xf32>
    %19 = arith.mulf %16, %18 : vector<2x512xf32>
    %cst_14 = arith.constant dense<0.000000e+00> : vector<2xf32>
    %20 = vector.multi_reduction <add>, %19, %cst_14 [1] : vector<2x512xf32> to vector<2xf32>
    %21 = vector.shape_cast %20 : vector<2xf32> to vector<2x1xf32>
    %c0_15 = arith.constant 0 : index
    %c0_16 = arith.constant 0 : index
    %22 = vector.load %arg7[%c0_15, %c0_16] : memref<1x1xf32, #tpu.memory_space<vmem>>, vector<1x1xf32>
    %23 = vector.broadcast %22 : vector<1x1xf32> to vector<2x1xf32>
    %24 = arith.addf %21, %23 : vector<2x1xf32>
    %c0_17 = arith.constant 0 : index
    %c0_18 = arith.constant 0 : index
    %25 = vector.load %arg8[%c0_17, %c0_18] : memref<2x1xf32, #tpu.memory_space<vmem>>, vector<2x1xf32>
    tpu.vector_store %arg8[%c0_17, %c0_18], %24 {strides = array<i32>} : memref<2x1xf32, #tpu.memory_space<vmem>>, vector<2x1xf32>,
    return
  }
  func.func @transform_0(%arg0: i32) -> (i32, i32) {
    %c0_i32 = arith.constant 0 : i32
    %c0_i32_0 = arith.constant 0 : i32
    return %arg0, %c0_i32 : i32, i32
  }
  func.func @transform_1(%arg0: i32) -> (i32, i32) {
    %c0_i32 = arith.constant 0 : i32
    %c0_i32_0 = arith.constant 0 : i32
    %c0_i32_1 = arith.constant 0 : i32
    return %c0_i32, %c0_i32_0 : i32, i32
  }
  func.func @transform_2(%arg0: i32) -> (i32, i32) {
    %c0_i32 = arith.constant 0 : i32
    %c0_i32_0 = arith.constant 0 : i32
    %c0_i32_1 = arith.constant 0 : i32
    return %c0_i32, %c0_i32_0 : i32, i32
  }
  func.func @transform_3(%arg0: i32) -> (i32, i32) {
    %c0_i32 = arith.constant 0 : i32
    %c0_i32_0 = arith.constant 0 : i32
    %c0_i32_1 = arith.constant 0 : i32
    return %c0_i32, %c0_i32_0 : i32, i32
  }
  func.func @transform_4(%arg0: i32) -> (i32, i32) {
    %c0_i32 = arith.constant 0 : i32
    %c0_i32_0 = arith.constant 0 : i32
    %c0_i32_1 = arith.constant 0 : i32
    return %c0_i32, %c0_i32_0 : i32, i32
  }
  func.func @transform_5(%arg0: i32) -> (i32, i32) {
    %c0_i32 = arith.constant 0 : i32
    %c0_i32_0 = arith.constant 0 : i32
    %c0_i32_1 = arith.constant 0 : i32
    return %c0_i32, %c0_i32_0 : i32, i32
  }
  func.func @transform_6(%arg0: i32) -> (i32, i32) {
    %c0_i32 = arith.constant 0 : i32
    %c0_i32_0 = arith.constant 0 : i32
    %c0_i32_1 = arith.constant 0 : i32
    return %c0_i32, %c0_i32_0 : i32, i32
  }
  func.func @transform_7(%arg0: i32) -> (i32, i32) {
    %c0_i32 = arith.constant 0 : i32
    %c0_i32_0 = arith.constant 0 : i32
    return %arg0, %c0_i32 : i32, i32
  }
}

</mosaic_0001>

<llo_original>
// kernel: critic_forward.1
$region0: #{critic_forward.1}
  #allocation0 [shape = 'u32[]', space=smem, size = 0x4, offset = 0x4, fixed_abs, tag = 'smem constant byte address 0x4 - core index']
  #allocation1 [shape = 'u32[144,128]{1,0:T(1,128)}', space=vmem, size = 0x12000, scoped, tag = 'internal scratch']
  #allocation2 [shape = 'f32[1,1]{1,0:T(1,128)S(1)}', space=vmem, size = 0x200, scoped, tag = 'scoped memory for critic_forward.1']
  %s0 = inlined_call_operand.vmem [shape: f32[2,1024], index: 0, kind: input, shape index: {}]
  %s1 = inlined_call_operand.hbm [shape: bf16[1024,128], index: 1, kind: input, shape index: {}]
  %s2 = inlined_call_operand.vmem [shape: f32[1,128], index: 2, kind: input, shape index: {}]
  %s3 = inlined_call_operand.hbm [shape: bf16[128,512], index: 3, kind: input, shape index: {}]
  %s4 = inlined_call_operand.vmem [shape: f32[1,512], index: 4, kind: input, shape index: {}]
  %s5 = inlined_call_operand.vmem [shape: f32[1,512], index: 5, kind: input, shape index: {}]
  %s6 = inlined_call_operand.<no memory space> [shape: f32[1,1], index: 6, kind: input, shape index: {}]
  %s7 = inlined_call_operand.vmem [shape: f32[2,1], index: 7, kind: output, shape index: {}]
  %s8 = sld [smem:[#allocation0]]
  $region46: #{critic_forward.1} parent=0
    _
  %s10 = ssub.s32 1, %s8
  %s11 = scalar_select 0, %s10, %s8
  %v12 = vstv %s6
  %13 = vst [vmem:[#allocation2] sm:$0x1] %v12
  $region1: #{critic_forward.1} parent=0
    #allocation3 [shape = 'u8[262144]{0}', space=vmem, size = 0x40000, scoped, tag = 'input window, operand 1, single buffered']
    #allocation4 [shape = 's32[1]{0}', space=sflag, size = 0x4, scoped, tag = 'scoped memory for critic_forward.1']
    #allocation5 [shape = 'u8[131072]{0}', space=vmem, size = 0x20000, scoped, tag = 'input window, operand 3, single buffered']
    #allocation6 [shape = 's32[1]{0}', space=sflag, size = 0x4, scoped, tag = 'scoped memory for critic_forward.1']
    %14 = vsyncpa [#allocation4], 0
    %15 = vsyncpa [#allocation6], 0
    // Predicated region
    $region2: #{critic_forward.1} parent=1 // pred_check
      _
    $region3: #{critic_forward.1} parent=1 // pred_check_branch
      %17 = sbr.rel (0) target = $region5
    $region4: #{critic_forward.1} parent=1 // pred_region
      _
    $region5: #{critic_forward.1} parent=1 // pred_fallthru
      _
    // Predicated region
    $region6: #{critic_forward.1} parent=1 // pred_check
      _
    $region7: #{critic_forward.1} parent=1 // pred_check_branch
      %19 = sbr.rel (0) target = $region9
    $region8: #{critic_forward.1} parent=1 // pred_region
      %s21 = ssub.s32 8192, 8192
      %22 = vsyncadd [#allocation4], %s21
      %s23 = sshll.u32 [#allocation3], 4
      %s24 = int_to_ptr.vmem [resolvable:$true] %s23
      %29 = dma.hbm_to_vmem [thread:$0]  %s1, 8192, %s24, [#allocation4], 64, 64, 4
    $region9: #{critic_forward.1} parent=1 // pred_fallthru
      _
    // Predicated region
    $region10: #{critic_forward.1} parent=1 // pred_check
      _
    $region11: #{critic_forward.1} parent=1 // pred_check_branch
      %31 = sbr.rel (0) target = $region13
    $region12: #{critic_forward.1} parent=1 // pred_region
      _
    $region13: #{critic_forward.1} parent=1 // pred_fallthru
      _
    // Predicated region
    $region14: #{critic_forward.1} parent=1 // pred_check
      _
    $region15: #{critic_forward.1} parent=1 // pred_check_branch
      %33 = sbr.rel (0) target = $region17
    $region16: #{critic_forward.1} parent=1 // pred_region
      %s35 = ssub.s32 4096, 4096
      %36 = vsyncadd [#allocation6], %s35
      %s37 = sshll.u32 [#allocation5], 4
      %s38 = int_to_ptr.vmem [resolvable:$true] %s37
      %43 = dma.hbm_to_vmem [thread:$0]  %s3, 4096, %s38, [#allocation6], 256, 256, 16
    $region17: #{critic_forward.1} parent=1 // pred_fallthru
      _
    // Predicated region
    $region18: #{critic_forward.1} parent=1 // pred_check
      _
    $region19: #{critic_forward.1} parent=1 // pred_check_branch
      %45 = sbr.rel (0) target = $region21
    $region20: #{critic_forward.1} parent=1 // pred_region
      _
    $region21: #{critic_forward.1} parent=1 // pred_fallthru
      _
    // Predicated region
    $region22: #{critic_forward.1} parent=1 // pred_check
      _
    $region23: #{critic_forward.1} parent=1 // pred_check_branch
      %47 = sbr.rel (0) target = $region25
    $region24: #{critic_forward.1} parent=1 // pred_region
      _
    $region25: #{critic_forward.1} parent=1 // pred_fallthru
      _
    // Predicated region
    $region26: #{critic_forward.1} parent=1 // pred_check
      _
    $region27: #{critic_forward.1} parent=1 // pred_check_branch
      %49 = sbr.rel (0) target = $region29
    $region28: #{critic_forward.1} parent=1 // pred_region
      _
    $region29: #{critic_forward.1} parent=1 // pred_fallthru
      _
    // Predicated region
    $region30: #{critic_forward.1} parent=1 // pred_check
      _
    $region31: #{critic_forward.1} parent=1 // pred_check_branch
      %51 = sbr.rel (0) target = $region33
    $region32: #{critic_forward.1} parent=1 // pred_region
      %52 = dma.done [#allocation4], 8192
    $region33: #{critic_forward.1} parent=1 // pred_fallthru
      _
    // Predicated region
    $region34: #{critic_forward.1} parent=1 // pred_check
      _
    $region35: #{critic_forward.1} parent=1 // pred_check_branch
      %54 = sbr.rel (0) target = $region37
    $region36: #{critic_forward.1} parent=1 // pred_region
      %55 = dma.done [#allocation6], 4096
    $region37: #{critic_forward.1} parent=1 // pred_fallthru
      _
    %v57 = vld [vmem:[%s0] sm:$0xff]
    %v58 = vld [vmem:[%s0 + $0x8] sm:$0xff]
    %v61 = vcombine.high %v57, %v57
    %v63 = vunpack.c.l.s4 1983009808
    %v64 = vunpack.c.0.s8 %v63
    %v65 = vlaneseq
    %v66 = vshrl.u32 %v65, 7
    %v67 = vsub.s32 %v64, %v66
    %v68 = vrot.slane %v57, %v67
    %v70 = vunpack.c.l.s4 1983009808
    %v71 = vunpack.c.0.s8 %v70
    %v72 = vlaneseq
    %v73 = vshrl.u32 %v72, 7
    %v74 = vsub.s32 %v71, %v73
    %v75 = vrot.slane %v61, %v74
    %v76 = vcombine.high %v68, %v68
    %v77 = vcombine.high %v75, %v75
    %v78 = vcombine.high %v58, %v58
    %v80 = vunpack.c.l.s4 1983009808
    %v81 = vunpack.c.0.s8 %v80
    %v82 = vlaneseq
    %v83 = vshrl.u32 %v82, 7
    %v84 = vsub.s32 %v81, %v83
    %v85 = vrot.slane %v58, %v84
    %v87 = vunpack.c.l.s4 1983009808
    %v88 = vunpack.c.0.s8 %v87
    %v89 = vlaneseq
    %v90 = vshrl.u32 %v89, 7
    %v91 = vsub.s32 %v88, %v90
    %v92 = vrot.slane %v78, %v91
    %v93 = vcombine.high %v85, %v85
    %v94 = vcombine.high %v92, %v92
    %v103 = vpack.c.bf16 %v68, %v68
    %v104 = vpack.c.bf16 %v76, %v76
    %v105 = vpack.c.bf16 %v75, %v75
    %v106 = vpack.c.bf16 %v77, %v77
    %v107 = vpack.c.bf16 %v85, %v85
    %v108 = vpack.c.bf16 %v93, %v93
    %v109 = vpack.c.bf16 %v92, %v92
    %v110 = vpack.c.bf16 %v94, %v94
    %v111 = vld [vmem:[#allocation3] sm:$0xf]
    %v112 = vld [vmem:[#allocation3 + $0x4] sm:$0xf]
    %v113 = vld [vmem:[#allocation3 + $0x8] sm:$0xf]
    %v114 = vld [vmem:[#allocation3 + $0xc] sm:$0xf]
    %v115 = vld [vmem:[#allocation3 + $0x10] sm:$0xf]
    %v116 = vld [vmem:[#allocation3 + $0x14] sm:$0xf]
    %v117 = vld [vmem:[#allocation3 + $0x18] sm:$0xf]
    %v118 = vld [vmem:[#allocation3 + $0x1c] sm:$0xf]
    %v119 = vld [vmem:[#allocation3 + $0x20] sm:$0xf]
    %v120 = vld [vmem:[#allocation3 + $0x24] sm:$0xf]
    %v121 = vld [vmem:[#allocation3 + $0x28] sm:$0xf]
    %v122 = vld [vmem:[#allocation3 + $0x2c] sm:$0xf]
    %v123 = vld [vmem:[#allocation3 + $0x30] sm:$0xf]
    %v124 = vld [vmem:[#allocation3 + $0x34] sm:$0xf]
    %v125 = vld [vmem:[#allocation3 + $0x38] sm:$0xf]
    %v126 = vld [vmem:[#allocation3 + $0x3c] sm:$0xf]
    %v127 = vld [vmem:[#allocation3 + $0x40] sm:$0xf]
    %v128 = vld [vmem:[#allocation3 + $0x44] sm:$0xf]
    %v129 = vld [vmem:[#allocation3 + $0x48] sm:$0xf]
    %v130 = vld [vmem:[#allocation3 + $0x4c] sm:$0xf]
    %v131 = vld [vmem:[#allocation3 + $0x50] sm:$0xf]
    %v132 = vld [vmem:[#allocation3 + $0x54] sm:$0xf]
    %v133 = vld [vmem:[#allocation3 + $0x58] sm:$0xf]
    %v134 = vld [vmem:[#allocation3 + $0x5c] sm:$0xf]
    %v135 = vld [vmem:[#allocation3 + $0x60] sm:$0xf]
    %v136 = vld [vmem:[#allocation3 + $0x64] sm:$0xf]
    %v137 = vld [vmem:[#allocation3 + $0x68] sm:$0xf]
    %v138 = vld [vmem:[#allocation3 + $0x6c] sm:$0xf]
    %v139 = vld [vmem:[#allocation3 + $0x70] sm:$0xf]
    %v140 = vld [vmem:[#allocation3 + $0x74] sm:$0xf]
    %v141 = vld [vmem:[#allocation3 + $0x78] sm:$0xf]
    %v142 = vld [vmem:[#allocation3 + $0x7c] sm:$0xf]
    %v143 = vld [vmem:[#allocation3 + $0x80] sm:$0xf]
    %v144 = vld [vmem:[#allocation3 + $0x84] sm:$0xf]
    %v145 = vld [vmem:[#allocation3 + $0x88] sm:$0xf]
    %v146 = vld [vmem:[#allocation3 + $0x8c] sm:$0xf]
    %v147 = vld [vmem:[#allocation3 + $0x90] sm:$0xf]
    %v148 = vld [vmem:[#allocation3 + $0x94] sm:$0xf]
    %v149 = vld [vmem:[#allocation3 + $0x98] sm:$0xf]
    %v150 = vld [vmem:[#allocation3 + $0x9c] sm:$0xf]
    %v151 = vld [vmem:[#allocation3 + $0xa0] sm:$0xf]
    %v152 = vld [vmem:[#allocation3 + $0xa4] sm:$0xf]
    %v153 = vld [vmem:[#allocation3 + $0xa8] sm:$0xf]
    %v154 = vld [vmem:[#allocation3 + $0xac] sm:$0xf]
    %v155 = vld [vmem:[#allocation3 + $0xb0] sm:$0xf]
    %v156 = vld [vmem:[#allocation3 + $0xb4] sm:$0xf]
    %v157 = vld [vmem:[#allocation3 + $0xb8] sm:$0xf]
    %v158 = vld [vmem:[#allocation3 + $0xbc] sm:$0xf]
    %v159 = vld [vmem:[#allocation3 + $0xc0] sm:$0xf]
    %v160 = vld [vmem:[#allocation3 + $0xc4] sm:$0xf]
    %v161 = vld [vmem:[#allocation3 + $0xc8] sm:$0xf]
    %v162 = vld [vmem:[#allocation3 + $0xcc] sm:$0xf]
    %v163 = vld [vmem:[#allocation3 + $0xd0] sm:$0xf]
    %v164 = vld [vmem:[#allocation3 + $0xd4] sm:$0xf]
    %v165 = vld [vmem:[#allocation3 + $0xd8] sm:$0xf]
    %v166 = vld [vmem:[#allocation3 + $0xdc] sm:$0xf]
    %v167 = vld [vmem:[#allocation3 + $0xe0] sm:$0xf]
    %v168 = vld [vmem:[#allocation3 + $0xe4] sm:$0xf]
    %v169 = vld [vmem:[#allocation3 + $0xe8] sm:$0xf]
    %v170 = vld [vmem:[#allocation3 + $0xec] sm:$0xf]
    %v171 = vld [vmem:[#allocation3 + $0xf0] sm:$0xf]
    %v172 = vld [vmem:[#allocation3 + $0xf4] sm:$0xf]
    %v173 = vld [vmem:[#allocation3 + $0xf8] sm:$0xf]
    %v174 = vld [vmem:[#allocation3 + $0xfc] sm:$0xf]
    %v175 = vld [vmem:[#allocation3 + $0x100] sm:$0xf]
    %v176 = vld [vmem:[#allocation3 + $0x104] sm:$0xf]
    %v177 = vld [vmem:[#allocation3 + $0x108] sm:$0xf]
    %v178 = vld [vmem:[#allocation3 + $0x10c] sm:$0xf]
    %v179 = vld [vmem:[#allocation3 + $0x110] sm:$0xf]
    %v180 = vld [vmem:[#allocation3 + $0x114] sm:$0xf]
    %v181 = vld [vmem:[#allocation3 + $0x118] sm:$0xf]
    %v182 = vld [vmem:[#allocation3 + $0x11c] sm:$0xf]
    %v183 = vld [vmem:[#allocation3 + $0x120] sm:$0xf]
    %v184 = vld [vmem:[#allocation3 + $0x124] sm:$0xf]
    %v185 = vld [vmem:[#allocation3 + $0x128] sm:$0xf]
    %v186 = vld [vmem:[#allocation3 + $0x12c] sm:$0xf]
    %v187 = vld [vmem:[#allocation3 + $0x130] sm:$0xf]
    %v188 = vld [vmem:[#allocation3 + $0x134] sm:$0xf]
    %v189 = vld [vmem:[#allocation3 + $0x138] sm:$0xf]
    %v190 = vld [vmem:[#allocation3 + $0x13c] sm:$0xf]
    %v191 = vld [vmem:[#allocation3 + $0x140] sm:$0xf]
    %v192 = vld [vmem:[#allocation3 + $0x144] sm:$0xf]
    %v193 = vld [vmem:[#allocation3 + $0x148] sm:$0xf]
    %v194 = vld [vmem:[#allocation3 + $0x14c] sm:$0xf]
    %v195 = vld [vmem:[#allocation3 + $0x150] sm:$0xf]
    %v196 = vld [vmem:[#allocation3 + $0x154] sm:$0xf]
    %v197 = vld [vmem:[#allocation3 + $0x158] sm:$0xf]
    %v198 = vld [vmem:[#allocation3 + $0x15c] sm:$0xf]
    %v199 = vld [vmem:[#allocation3 + $0x160] sm:$0xf]
    %v200 = vld [vmem:[#allocation3 + $0x164] sm:$0xf]
    %v201 = vld [vmem:[#allocation3 + $0x168] sm:$0xf]
    %v202 = vld [vmem:[#allocation3 + $0x16c] sm:$0xf]
    %v203 = vld [vmem:[#allocation3 + $0x170] sm:$0xf]
    %v204 = vld [vmem:[#allocation3 + $0x174] sm:$0xf]
    %v205 = vld [vmem:[#allocation3 + $0x178] sm:$0xf]
    %v206 = vld [vmem:[#allocation3 + $0x17c] sm:$0xf]
    %v207 = vld [vmem:[#allocation3 + $0x180] sm:$0xf]
    %v208 = vld [vmem:[#allocation3 + $0x184] sm:$0xf]
    %v209 = vld [vmem:[#allocation3 + $0x188] sm:$0xf]
    %v210 = vld [vmem:[#allocation3 + $0x18c] sm:$0xf]
    %v211 = vld [vmem:[#allocation3 + $0x190] sm:$0xf]
    %v212 = vld [vmem:[#allocation3 + $0x194] sm:$0xf]
    %v213 = vld [vmem:[#allocation3 + $0x198] sm:$0xf]
    %v214 = vld [vmem:[#allocation3 + $0x19c] sm:$0xf]
    %v215 = vld [vmem:[#allocation3 + $0x1a0] sm:$0xf]
    %v216 = vld [vmem:[#allocation3 + $0x1a4] sm:$0xf]
    %v217 = vld [vmem:[#allocation3 + $0x1a8] sm:$0xf]
    %v218 = vld [vmem:[#allocation3 + $0x1ac] sm:$0xf]
    %v219 = vld [vmem:[#allocation3 + $0x1b0] sm:$0xf]
    %v220 = vld [vmem:[#allocation3 + $0x1b4] sm:$0xf]
    %v221 = vld [vmem:[#allocation3 + $0x1b8] sm:$0xf]
    %v222 = vld [vmem:[#allocation3 + $0x1bc] sm:$0xf]
    %v223 = vld [vmem:[#allocation3 + $0x1c0] sm:$0xf]
    %v224 = vld [vmem:[#allocation3 + $0x1c4] sm:$0xf]
    %v225 = vld [vmem:[#allocation3 + $0x1c8] sm:$0xf]
    %v226 = vld [vmem:[#allocation3 + $0x1cc] sm:$0xf]
    %v227 = vld [vmem:[#allocation3 + $0x1d0] sm:$0xf]
    %v228 = vld [vmem:[#allocation3 + $0x1d4] sm:$0xf]
    %v229 = vld [vmem:[#allocation3 + $0x1d8] sm:$0xf]
    %v230 = vld [vmem:[#allocation3 + $0x1dc] sm:$0xf]
    %v231 = vld [vmem:[#allocation3 + $0x1e0] sm:$0xf]
    %v232 = vld [vmem:[#allocation3 + $0x1e4] sm:$0xf]
    %v233 = vld [vmem:[#allocation3 + $0x1e8] sm:$0xf]
    %v234 = vld [vmem:[#allocation3 + $0x1ec] sm:$0xf]
    %v235 = vld [vmem:[#allocation3 + $0x1f0] sm:$0xf]
    %v236 = vld [vmem:[#allocation3 + $0x1f4] sm:$0xf]
    %v237 = vld [vmem:[#allocation3 + $0x1f8] sm:$0xf]
    %v238 = vld [vmem:[#allocation3 + $0x1fc] sm:$0xf]
    %v239 = vld [vmem:[%s2] sm:$0x1]
    %v241 = vlaneseq
    %v242 = vshrl.u32 %v241, 7
    %v243 = vsub.s32 0, %v242
    %v244 = vrot.slane %v239, %v243
    %v374 = vunpack.c.l.b16 %v111
    %v375 = vunpack.c.l.b16 %v112
    %v376 = vunpack.c.l.b16 %v113
    %v377 = vunpack.c.l.b16 %v114
    %v378 = vunpack.c.l.b16 %v115
    %v379 = vunpack.c.l.b16 %v116
    %v380 = vunpack.c.l.b16 %v117
    %v381 = vunpack.c.l.b16 %v118
    %v382 = vunpack.c.l.b16 %v119
    %v383 = vunpack.c.l.b16 %v120
    %v384 = vunpack.c.l.b16 %v121
    %v385 = vunpack.c.l.b16 %v122
    %v386 = vunpack.c.l.b16 %v123
    %v387 = vunpack.c.l.b16 %v124
    %v388 = vunpack.c.l.b16 %v125
    %v389 = vunpack.c.l.b16 %v126
    %v390 = vunpack.c.l.b16 %v127
    %v391 = vunpack.c.l.b16 %v128
    %v392 = vunpack.c.l.b16 %v129
    %v393 = vunpack.c.l.b16 %v130
    %v394 = vunpack.c.l.b16 %v131
    %v395 = vunpack.c.l.b16 %v132
    %v396 = vunpack.c.l.b16 %v133
    %v397 = vunpack.c.l.b16 %v134
    %v398 = vunpack.c.l.b16 %v135
    %v399 = vunpack.c.l.b16 %v136
    %v400 = vunpack.c.l.b16 %v137
    %v401 = vunpack.c.l.b16 %v138
    %v402 = vunpack.c.l.b16 %v139
    %v403 = vunpack.c.l.b16 %v140
    %v404 = vunpack.c.l.b16 %v141
    %v405 = vunpack.c.l.b16 %v142
    %v406 = vunpack.c.l.b16 %v143
    %v407 = vunpack.c.l.b16 %v144
    %v408 = vunpack.c.l.b16 %v145
    %v409 = vunpack.c.l.b16 %v146
    %v410 = vunpack.c.l.b16 %v147
    %v411 = vunpack.c.l.b16 %v148
    %v412 = vunpack.c.l.b16 %v149
    %v413 = vunpack.c.l.b16 %v150
    %v414 = vunpack.c.l.b16 %v151
    %v415 = vunpack.c.l.b16 %v152
    %v416 = vunpack.c.l.b16 %v153
    %v417 = vunpack.c.l.b16 %v154
    %v418 = vunpack.c.l.b16 %v155
    %v419 = vunpack.c.l.b16 %v156
    %v420 = vunpack.c.l.b16 %v157
    %v421 = vunpack.c.l.b16 %v158
    %v422 = vunpack.c.l.b16 %v159
    %v423 = vunpack.c.l.b16 %v160
    %v424 = vunpack.c.l.b16 %v161
    %v425 = vunpack.c.l.b16 %v162
    %v426 = vunpack.c.l.b16 %v163
    %v427 = vunpack.c.l.b16 %v164
    %v428 = vunpack.c.l.b16 %v165
    %v429 = vunpack.c.l.b16 %v166
    %v430 = vunpack.c.l.b16 %v167
    %v431 = vunpack.c.l.b16 %v168
    %v432 = vunpack.c.l.b16 %v169
    %v433 = vunpack.c.l.b16 %v170
    %v434 = vunpack.c.l.b16 %v171
    %v435 = vunpack.c.l.b16 %v172
    %v436 = vunpack.c.l.b16 %v173
    %v437 = vunpack.c.l.b16 %v174
    %v438 = vunpack.c.l.b16 %v175
    %v439 = vunpack.c.l.b16 %v176
    %v440 = vunpack.c.l.b16 %v177
    %v441 = vunpack.c.l.b16 %v178
    %v442 = vunpack.c.l.b16 %v179
    %v443 = vunpack.c.l.b16 %v180
    %v444 = vunpack.c.l.b16 %v181
    %v445 = vunpack.c.l.b16 %v182
    %v446 = vunpack.c.l.b16 %v183
    %v447 = vunpack.c.l.b16 %v184
    %v448 = vunpack.c.l.b16 %v185
    %v449 = vunpack.c.l.b16 %v186
    %v450 = vunpack.c.l.b16 %v187
    %v451 = vunpack.c.l.b16 %v188
    %v452 = vunpack.c.l.b16 %v189
    %v453 = vunpack.c.l.b16 %v190
    %v454 = vunpack.c.l.b16 %v191
    %v455 = vunpack.c.l.b16 %v192
    %v456 = vunpack.c.l.b16 %v193
    %v457 = vunpack.c.l.b16 %v194
    %v458 = vunpack.c.l.b16 %v195
    %v459 = vunpack.c.l.b16 %v196
    %v460 = vunpack.c.l.b16 %v197
    %v461 = vunpack.c.l.b16 %v198
    %v462 = vunpack.c.l.b16 %v199
    %v463 = vunpack.c.l.b16 %v200
    %v464 = vunpack.c.l.b16 %v201
    %v465 = vunpack.c.l.b16 %v202
    %v466 = vunpack.c.l.b16 %v203
    %v467 = vunpack.c.l.b16 %v204
    %v468 = vunpack.c.l.b16 %v205
    %v469 = vunpack.c.l.b16 %v206
    %v470 = vunpack.c.l.b16 %v207
    %v471 = vunpack.c.l.b16 %v208
    %v472 = vunpack.c.l.b16 %v209
    %v473 = vunpack.c.l.b16 %v210
    %v474 = vunpack.c.l.b16 %v211
    %v475 = vunpack.c.l.b16 %v212
    %v476 = vunpack.c.l.b16 %v213
    %v477 = vunpack.c.l.b16 %v214
    %v478 = vunpack.c.l.b16 %v215
    %v479 = vunpack.c.l.b16 %v216
    %v480 = vunpack.c.l.b16 %v217
    %v481 = vunpack.c.l.b16 %v218
    %v482 = vunpack.c.l.b16 %v219
    %v483 = vunpack.c.l.b16 %v220
    %v484 = vunpack.c.l.b16 %v221
    %v485 = vunpack.c.l.b16 %v222
    %v486 = vunpack.c.l.b16 %v223
    %v487 = vunpack.c.l.b16 %v224
    %v488 = vunpack.c.l.b16 %v225
    %v489 = vunpack.c.l.b16 %v226
    %v490 = vunpack.c.l.b16 %v227
    %v491 = vunpack.c.l.b16 %v228
    %v492 = vunpack.c.l.b16 %v229
    %v493 = vunpack.c.l.b16 %v230
    %v494 = vunpack.c.l.b16 %v231
    %v495 = vunpack.c.l.b16 %v232
    %v496 = vunpack.c.l.b16 %v233
    %v497 = vunpack.c.l.b16 %v234
    %v498 = vunpack.c.l.b16 %v235
    %v499 = vunpack.c.l.b16 %v236
    %v500 = vunpack.c.l.b16 %v237
    %v501 = vunpack.c.l.b16 %v238
    %v502 = vpack.c.b16 %v375, %v374
    %v503 = vpack.c.b16 %v377, %v376
    %v504 = vpack.c.b16 %v379, %v378
    %v505 = vpack.c.b16 %v381, %v380
    %v506 = vpack.c.b16 %v383, %v382
    %v507 = vpack.c.b16 %v385, %v384
    %v508 = vpack.c.b16 %v387, %v386
    %v509 = vpack.c.b16 %v389, %v388
    %v510 = vpack.c.b16 %v391, %v390
    %v511 = vpack.c.b16 %v393, %v392
    %v512 = vpack.c.b16 %v395, %v394
    %v513 = vpack.c.b16 %v397, %v396
    %v514 = vpack.c.b16 %v399, %v398
    %v515 = vpack.c.b16 %v401, %v400
    %v516 = vpack.c.b16 %v403, %v402
    %v517 = vpack.c.b16 %v405, %v404
    %v518 = vpack.c.b16 %v407, %v406
    %v519 = vpack.c.b16 %v409, %v408
    %v520 = vpack.c.b16 %v411, %v410
    %v521 = vpack.c.b16 %v413, %v412
    %v522 = vpack.c.b16 %v415, %v414
    %v523 = vpack.c.b16 %v417, %v416
    %v524 = vpack.c.b16 %v419, %v418
    %v525 = vpack.c.b16 %v421, %v420
    %v526 = vpack.c.b16 %v423, %v422
    %v527 = vpack.c.b16 %v425, %v424
    %v528 = vpack.c.b16 %v427, %v426
    %v529 = vpack.c.b16 %v429, %v428
    %v530 = vpack.c.b16 %v431, %v430
    %v531 = vpack.c.b16 %v433, %v432
    %v532 = vpack.c.b16 %v435, %v434
    %v533 = vpack.c.b16 %v437, %v436
    %v534 = vpack.c.b16 %v439, %v438
    %v535 = vpack.c.b16 %v441, %v440
    %v536 = vpack.c.b16 %v443, %v442
    %v537 = vpack.c.b16 %v445, %v444
    %v538 = vpack.c.b16 %v447, %v446
    %v539 = vpack.c.b16 %v449, %v448
    %v540 = vpack.c.b16 %v451, %v450
    %v541 = vpack.c.b16 %v453, %v452
    %v542 = vpack.c.b16 %v455, %v454
    %v543 = vpack.c.b16 %v457, %v456
    %v544 = vpack.c.b16 %v459, %v458
    %v545 = vpack.c.b16 %v461, %v460
    %v546 = vpack.c.b16 %v463, %v462
    %v547 = vpack.c.b16 %v465, %v464
    %v548 = vpack.c.b16 %v467, %v466
    %v549 = vpack.c.b16 %v469, %v468
    %v550 = vpack.c.b16 %v471, %v470
    %v551 = vpack.c.b16 %v473, %v472
    %v552 = vpack.c.b16 %v475, %v474
    %v553 = vpack.c.b16 %v477, %v476
    %v554 = vpack.c.b16 %v479, %v478
    %v555 = vpack.c.b16 %v481, %v480
    %v556 = vpack.c.b16 %v483, %v482
    %v557 = vpack.c.b16 %v485, %v484
    %v558 = vpack.c.b16 %v487, %v486
    %v559 = vpack.c.b16 %v489, %v488
    %v560 = vpack.c.b16 %v491, %v490
    %v561 = vpack.c.b16 %v493, %v492
    %v562 = vpack.c.b16 %v495, %v494
    %v563 = vpack.c.b16 %v497, %v496
    %v564 = vpack.c.b16 %v499, %v498
    %v565 = vpack.c.b16 %v501, %v500
    %630 = vmatprep.subr.bf16.mxu0 0
    %631 = vmatpush1.bf16.msra.mxu0 %v502
    %632 = vmatprep.subr.bf16.mxu0 0
    %633 = vmatpush1.bf16.msra.mxu0 %v503
    %634 = vmatprep.subr.bf16.mxu0 0
    %635 = vmatpush1.bf16.msra.mxu0 %v504
    %636 = vmatprep.subr.bf16.mxu0 0
    %637 = vmatpush1.bf16.msra.mxu0 %v505
    %638 = vmatprep.subr.bf16.mxu0 0
    %639 = vmatpush1.bf16.msra.mxu0 %v506
    %640 = vmatprep.subr.bf16.mxu0 0
    %641 = vmatpush1.bf16.msra.mxu0 %v507
    %642 = vmatprep.subr.bf16.mxu0 0
    %643 = vmatpush1.bf16.msra.mxu0 %v508
    %644 = vmatprep.subr.bf16.mxu0 0
    %645 = vmatpush1.bf16.msra.mxu0 %v509
    %646 = vmatprep.subr.bf16.mxu0 0
    %647 = vmatpush1.bf16.msra.mxu0 %v510
    %648 = vmatprep.subr.bf16.mxu0 0
    %649 = vmatpush1.bf16.msra.mxu0 %v511
    %650 = vmatprep.subr.bf16.mxu0 0
    %651 = vmatpush1.bf16.msra.mxu0 %v512
    %652 = vmatprep.subr.bf16.mxu0 0
    %653 = vmatpush1.bf16.msra.mxu0 %v513
    %654 = vmatprep.subr.bf16.mxu0 0
    %655 = vmatpush1.bf16.msra.mxu0 %v514
    %656 = vmatprep.subr.bf16.mxu0 0
    %657 = vmatpush1.bf16.msra.mxu0 %v515
    %658 = vmatprep.subr.bf16.mxu0 0
    %659 = vmatpush1.bf16.msra.mxu0 %v516
    %660 = vmatprep.subr.bf16.mxu0 0
    %661 = vmatpush1.bf16.msra.mxu0 %v517
    %662 = vmatprep.mubr.bf16.mxu0 %v104
    %663 = vmatmul.mubr.bf16.gmra.mrb[0].mxu0 %v103
    %v664 = vpop.f32.mrb[0].mxu0
    %v665 = vadd.f32 %v244, %v664
    %v666 = vpop.f32.mrb[0].mxu0
    %v667 = vpop.f32.mrb[0].mxu0
    %v668 = vpop.f32.mrb[0].mxu0
    %669 = vdwg.mxu0
    %670 = vmatprep.subr.bf16.mxu0 0
    %671 = vmatpush1.bf16.msra.mxu0 %v518
    %672 = vmatprep.subr.bf16.mxu0 0
    %673 = vmatpush1.bf16.msra.mxu0 %v519
    %674 = vmatprep.subr.bf16.mxu0 0
    %675 = vmatpush1.bf16.msra.mxu0 %v520
    %676 = vmatprep.subr.bf16.mxu0 0
    %677 = vmatpush1.bf16.msra.mxu0 %v521
    %678 = vmatprep.subr.bf16.mxu0 0
    %679 = vmatpush1.bf16.msra.mxu0 %v522
    %680 = vmatprep.subr.bf16.mxu0 0
    %681 = vmatpush1.bf16.msra.mxu0 %v523
    %682 = vmatprep.subr.bf16.mxu0 0
    %683 = vmatpush1.bf16.msra.mxu0 %v524
    %684 = vmatprep.subr.bf16.mxu0 0
    %685 = vmatpush1.bf16.msra.mxu0 %v525
    %686 = vmatprep.subr.bf16.mxu0 0
    %687 = vmatpush1.bf16.msra.mxu0 %v526
    %688 = vmatprep.subr.bf16.mxu0 0
    %689 = vmatpush1.bf16.msra.mxu0 %v527
    %690 = vmatprep.subr.bf16.mxu0 0
    %691 = vmatpush1.bf16.msra.mxu0 %v528
    %692 = vmatprep.subr.bf16.mxu0 0
    %693 = vmatpush1.bf16.msra.mxu0 %v529
    %694 = vmatprep.subr.bf16.mxu0 0
    %695 = vmatpush1.bf16.msra.mxu0 %v530
    %696 = vmatprep.subr.bf16.mxu0 0
    %697 = vmatpush1.bf16.msra.mxu0 %v531
    %698 = vmatprep.subr.bf16.mxu0 0
    %699 = vmatpush1.bf16.msra.mxu0 %v532
    %700 = vmatprep.subr.bf16.mxu0 0
    %701 = vmatpush1.bf16.msra.mxu0 %v533
    %702 = vmatprep.mubr.bf16.mxu0 %v106
    %703 = vmatmul.mubr.bf16.gmra.mrb[0].mxu0 %v105
    %v704 = vpop.f32.mrb[0].mxu0
    %v705 = vadd.f32 %v665, %v704
    %v706 = vpop.f32.mrb[0].mxu0
    %v707 = vpop.f32.mrb[0].mxu0
    %v708 = vpop.f32.mrb[0].mxu0
    %709 = vdwg.mxu0
    %710 = vmatprep.subr.bf16.mxu0 0
    %711 = vmatpush1.bf16.msra.mxu0 %v534
    %712 = vmatprep.subr.bf16.mxu0 0
    %713 = vmatpush1.bf16.msra.mxu0 %v535
    %714 = vmatprep.subr.bf16.mxu0 0
    %715 = vmatpush1.bf16.msra.mxu0 %v536
    %716 = vmatprep.subr.bf16.mxu0 0
    %717 = vmatpush1.bf16.msra.mxu0 %v537
    %718 = vmatprep.subr.bf16.mxu0 0
    %719 = vmatpush1.bf16.msra.mxu0 %v538
    %720 = vmatprep.subr.bf16.mxu0 0
    %721 = vmatpush1.bf16.msra.mxu0 %v539
    %722 = vmatprep.subr.bf16.mxu0 0
    %723 = vmatpush1.bf16.msra.mxu0 %v540
    %724 = vmatprep.subr.bf16.mxu0 0
    %725 = vmatpush1.bf16.msra.mxu0 %v541
    %726 = vmatprep.subr.bf16.mxu0 0
    %727 = vmatpush1.bf16.msra.mxu0 %v542
    %728 = vmatprep.subr.bf16.mxu0 0
    %729 = vmatpush1.bf16.msra.mxu0 %v543
    %730 = vmatprep.subr.bf16.mxu0 0
    %731 = vmatpush1.bf16.msra.mxu0 %v544
    %732 = vmatprep.subr.bf16.mxu0 0
    %733 = vmatpush1.bf16.msra.mxu0 %v545
    %734 = vmatprep.subr.bf16.mxu0 0
    %735 = vmatpush1.bf16.msra.mxu0 %v546
    %736 = vmatprep.subr.bf16.mxu0 0
    %737 = vmatpush1.bf16.msra.mxu0 %v547
    %738 = vmatprep.subr.bf16.mxu0 0
    %739 = vmatpush1.bf16.msra.mxu0 %v548
    %740 = vmatprep.subr.bf16.mxu0 0
    %741 = vmatpush1.bf16.msra.mxu0 %v549
    %742 = vmatprep.mubr.bf16.mxu0 %v108
    %743 = vmatmul.mubr.bf16.gmra.mrb[0].mxu0 %v107
    %v744 = vpop.f32.mrb[0].mxu0
    %v745 = vadd.f32 %v705, %v744
    %v746 = vpop.f32.mrb[0].mxu0
    %v747 = vpop.f32.mrb[0].mxu0
    %v748 = vpop.f32.mrb[0].mxu0
    %749 = vdwg.mxu0
    %750 = vmatprep.subr.bf16.mxu0 0
    %751 = vmatpush1.bf16.msra.mxu0 %v550
    %752 = vmatprep.subr.bf16.mxu0 0
    %753 = vmatpush1.bf16.msra.mxu0 %v551
    %754 = vmatprep.subr.bf16.mxu0 0
    %755 = vmatpush1.bf16.msra.mxu0 %v552
    %756 = vmatprep.subr.bf16.mxu0 0
    %757 = vmatpush1.bf16.msra.mxu0 %v553
    %758 = vmatprep.subr.bf16.mxu0 0
    %759 = vmatpush1.bf16.msra.mxu0 %v554
    %760 = vmatprep.subr.bf16.mxu0 0
    %761 = vmatpush1.bf16.msra.mxu0 %v555
    %762 = vmatprep.subr.bf16.mxu0 0
    %763 = vmatpush1.bf16.msra.mxu0 %v556
    %764 = vmatprep.subr.bf16.mxu0 0
    %765 = vmatpush1.bf16.msra.mxu0 %v557
    %766 = vmatprep.subr.bf16.mxu0 0
    %767 = vmatpush1.bf16.msra.mxu0 %v558
    %768 = vmatprep.subr.bf16.mxu0 0
    %769 = vmatpush1.bf16.msra.mxu0 %v559
    %770 = vmatprep.subr.bf16.mxu0 0
    %771 = vmatpush1.bf16.msra.mxu0 %v560
    %772 = vmatprep.subr.bf16.mxu0 0
    %773 = vmatpush1.bf16.msra.mxu0 %v561
    %774 = vmatprep.subr.bf16.mxu0 0
    %775 = vmatpush1.bf16.msra.mxu0 %v562
    %776 = vmatprep.subr.bf16.mxu0 0
    %777 = vmatpush1.bf16.msra.mxu0 %v563
    %778 = vmatprep.subr.bf16.mxu0 0
    %779 = vmatpush1.bf16.msra.mxu0 %v564
    %780 = vmatprep.subr.bf16.mxu0 0
    %781 = vmatpush1.bf16.msra.mxu0 %v565
    %782 = vmatprep.mubr.bf16.mxu0 %v110
    %783 = vmatmul.mubr.bf16.gmra.mrb[0].mxu0 %v109
    %v784 = vpop.f32.mrb[0].mxu0
    %v785 = vadd.f32 %v745, %v784
    %v786 = vpop.f32.mrb[0].mxu0
    %v787 = vpop.f32.mrb[0].mxu0
    %v788 = vpop.f32.mrb[0].mxu0
    %789 = vdwg.mxu0
    %v790 = vmax.f32 %v785, 0.0
    %v791 = vpack.c.bf16 %v790, %v790
    %v792 = vld [vmem:[#allocation5] sm:$0xff]
    %v793 = vld [vmem:[#allocation5 + $0x8] sm:$0xff]
    %v794 = vld [vmem:[#allocation5 + $0x10] sm:$0xff]
    %v795 = vld [vmem:[#allocation5 + $0x18] sm:$0xff]
    %v796 = vld [vmem:[#allocation5 + $0x20] sm:$0xff]
    %v797 = vld [vmem:[#allocation5 + $0x28] sm:$0xff]
    %v798 = vld [vmem:[#allocation5 + $0x30] sm:$0xff]
    %v799 = vld [vmem:[#allocation5 + $0x38] sm:$0xff]
    %v800 = vld [vmem:[#allocation5 + $0x40] sm:$0xff]
    %v801 = vld [vmem:[#allocation5 + $0x48] sm:$0xff]
    %v802 = vld [vmem:[#allocation5 + $0x50] sm:$0xff]
    %v803 = vld [vmem:[#allocation5 + $0x58] sm:$0xff]
    %v804 = vld [vmem:[#allocation5 + $0x60] sm:$0xff]
    %v805 = vld [vmem:[#allocation5 + $0x68] sm:$0xff]
    %v806 = vld [vmem:[#allocation5 + $0x70] sm:$0xff]
    %v807 = vld [vmem:[#allocation5 + $0x78] sm:$0xff]
    %v808 = vld [vmem:[#allocation5 + $0x80] sm:$0xff]
    %v809 = vld [vmem:[#allocation5 + $0x88] sm:$0xff]
    %v810 = vld [vmem:[#allocation5 + $0x90] sm:$0xff]
    %v811 = vld [vmem:[#allocation5 + $0x98] sm:$0xff]
    %v812 = vld [vmem:[#allocation5 + $0xa0] sm:$0xff]
    %v813 = vld [vmem:[#allocation5 + $0xa8] sm:$0xff]
    %v814 = vld [vmem:[#allocation5 + $0xb0] sm:$0xff]
    %v815 = vld [vmem:[#allocation5 + $0xb8] sm:$0xff]
    %v816 = vld [vmem:[#allocation5 + $0xc0] sm:$0xff]
    %v817 = vld [vmem:[#allocation5 + $0xc8] sm:$0xff]
    %v818 = vld [vmem:[#allocation5 + $0xd0] sm:$0xff]
    %v819 = vld [vmem:[#allocation5 + $0xd8] sm:$0xff]
    %v820 = vld [vmem:[#allocation5 + $0xe0] sm:$0xff]
    %v821 = vld [vmem:[#allocation5 + $0xe8] sm:$0xff]
    %v822 = vld [vmem:[#allocation5 + $0xf0] sm:$0xff]
    %v823 = vld [vmem:[#allocation5 + $0xf8] sm:$0xff]
    %v824 = vld [vmem:[%s4] sm:$0xf]
    %v826 = vlaneseq
    %v827 = vshrl.u32 %v826, 7
    %v828 = vsub.s32 0, %v827
    %v829 = vrot.slane %v824, %v828
    %v830 = vlaneseq
    %v831 = vshrl.u32 %v830, 7
    %v832 = vsub.s32 1, %v831
    %v833 = vrot.slane %v824, %v832
    %v834 = vlaneseq
    %v835 = vshrl.u32 %v834, 7
    %v836 = vsub.s32 2, %v835
    %v837 = vrot.slane %v824, %v836
    %v838 = vlaneseq
    %v839 = vshrl.u32 %v838, 7
    %v840 = vsub.s32 3, %v839
    %v841 = vrot.slane %v824, %v840
    %v878 = vunpack.c.l.b16 %v792
    %v879 = vunpack.c.h.b16 %v792
    %v880 = vunpack.c.l.b16 %v793
    %v881 = vunpack.c.h.b16 %v793
    %v882 = vunpack.c.l.b16 %v794
    %v883 = vunpack.c.h.b16 %v794
    %v884 = vunpack.c.l.b16 %v795
    %v885 = vunpack.c.h.b16 %v795
    %v886 = vunpack.c.l.b16 %v796
    %v887 = vunpack.c.h.b16 %v796
    %v888 = vunpack.c.l.b16 %v797
    %v889 = vunpack.c.h.b16 %v797
    %v890 = vunpack.c.l.b16 %v798
    %v891 = vunpack.c.h.b16 %v798
    %v892 = vunpack.c.l.b16 %v799
    %v893 = vunpack.c.h.b16 %v799
    %v894 = vunpack.c.l.b16 %v800
    %v895 = vunpack.c.h.b16 %v800
    %v896 = vunpack.c.l.b16 %v801
    %v897 = vunpack.c.h.b16 %v801
    %v898 = vunpack.c.l.b16 %v802
    %v899 = vunpack.c.h.b16 %v802
    %v900 = vunpack.c.l.b16 %v803
    %v901 = vunpack.c.h.b16 %v803
    %v902 = vunpack.c.l.b16 %v804
    %v903 = vunpack.c.h.b16 %v804
    %v904 = vunpack.c.l.b16 %v805
    %v905 = vunpack.c.h.b16 %v805
    %v906 = vunpack.c.l.b16 %v806
    %v907 = vunpack.c.h.b16 %v806
    %v908 = vunpack.c.l.b16 %v807
    %v909 = vunpack.c.h.b16 %v807
    %v910 = vunpack.c.l.b16 %v808
    %v911 = vunpack.c.h.b16 %v808
    %v912 = vunpack.c.l.b16 %v809
    %v913 = vunpack.c.h.b16 %v809
    %v914 = vunpack.c.l.b16 %v810
    %v915 = vunpack.c.h.b16 %v810
    %v916 = vunpack.c.l.b16 %v811
    %v917 = vunpack.c.h.b16 %v811
    %v918 = vunpack.c.l.b16 %v812
    %v919 = vunpack.c.h.b16 %v812
    %v920 = vunpack.c.l.b16 %v813
    %v921 = vunpack.c.h.b16 %v813
    %v922 = vunpack.c.l.b16 %v814
    %v923 = vunpack.c.h.b16 %v814
    %v924 = vunpack.c.l.b16 %v815
    %v925 = vunpack.c.h.b16 %v815
    %v926 = vunpack.c.l.b16 %v816
    %v927 = vunpack.c.h.b16 %v816
    %v928 = vunpack.c.l.b16 %v817
    %v929 = vunpack.c.h.b16 %v817
    %v930 = vunpack.c.l.b16 %v818
    %v931 = vunpack.c.h.b16 %v818
    %v932 = vunpack.c.l.b16 %v819
    %v933 = vunpack.c.h.b16 %v819
    %v934 = vunpack.c.l.b16 %v820
    %v935 = vunpack.c.h.b16 %v820
    %v936 = vunpack.c.l.b16 %v821
    %v937 = vunpack.c.h.b16 %v821
    %v938 = vunpack.c.l.b16 %v822
    %v939 = vunpack.c.h.b16 %v822
    %v940 = vunpack.c.l.b16 %v823
    %v941 = vunpack.c.h.b16 %v823
    %v942 = vpack.c.b16 %v882, %v878
    %v943 = vpack.c.b16 %v883, %v879
    %v944 = vpack.c.b16 %v884, %v880
    %v945 = vpack.c.b16 %v885, %v881
    %v946 = vpack.c.b16 %v890, %v886
    %v947 = vpack.c.b16 %v891, %v887
    %v948 = vpack.c.b16 %v892, %v888
    %v949 = vpack.c.b16 %v893, %v889
    %v950 = vpack.c.b16 %v898, %v894
    %v951 = vpack.c.b16 %v899, %v895
    %v952 = vpack.c.b16 %v900, %v896
    %v953 = vpack.c.b16 %v901, %v897
    %v954 = vpack.c.b16 %v906, %v902
    %v955 = vpack.c.b16 %v907, %v903
    %v956 = vpack.c.b16 %v908, %v904
    %v957 = vpack.c.b16 %v909, %v905
    %v958 = vpack.c.b16 %v914, %v910
    %v959 = vpack.c.b16 %v915, %v911
    %v960 = vpack.c.b16 %v916, %v912
    %v961 = vpack.c.b16 %v917, %v913
    %v962 = vpack.c.b16 %v922, %v918
    %v963 = vpack.c.b16 %v923, %v919
    %v964 = vpack.c.b16 %v924, %v920
    %v965 = vpack.c.b16 %v925, %v921
    %v966 = vpack.c.b16 %v930, %v926
    %v967 = vpack.c.b16 %v931, %v927
    %v968 = vpack.c.b16 %v932, %v928
    %v969 = vpack.c.b16 %v933, %v929
    %v970 = vpack.c.b16 %v938, %v934
    %v971 = vpack.c.b16 %v939, %v935
    %v972 = vpack.c.b16 %v940, %v936
    %v973 = vpack.c.b16 %v941, %v937
    %1006 = vmatprep.subr.bf16.mxu0 %v943
    %1007 = vmatpush1.bf16.msra.mxu0 %v942
    %1008 = vmatprep.subr.bf16.mxu0 %v947
    %1009 = vmatpush1.bf16.msra.mxu0 %v946
    %1010 = vmatprep.subr.bf16.mxu0 %v951
    %1011 = vmatpush1.bf16.msra.mxu0 %v950
    %1012 = vmatprep.subr.bf16.mxu0 %v955
    %1013 = vmatpush1.bf16.msra.mxu0 %v954
    %1014 = vmatprep.subr.bf16.mxu0 %v959
    %1015 = vmatpush1.bf16.msra.mxu0 %v958
    %1016 = vmatprep.subr.bf16.mxu0 %v963
    %1017 = vmatpush1.bf16.msra.mxu0 %v962
    %1018 = vmatprep.subr.bf16.mxu0 %v967
    %1019 = vmatpush1.bf16.msra.mxu0 %v966
    %1020 = vmatprep.subr.bf16.mxu0 %v971
    %1021 = vmatpush1.bf16.msra.mxu0 %v970
    %1022 = vmatprep.subr.bf16.mxu0 0
    %1023 = vmatpush1.bf16.msra.mxu0 0
    %1024 = vmatprep.subr.bf16.mxu0 0
    %1025 = vmatpush1.bf16.msra.mxu0 0
    %1026 = vmatprep.subr.bf16.mxu0 0
    %1027 = vmatpush1.bf16.msra.mxu0 0
    %1028 = vmatprep.subr.bf16.mxu0 0
    %1029 = vmatpush1.bf16.msra.mxu0 0
    %1030 = vmatprep.subr.bf16.mxu0 0
    %1031 = vmatpush1.bf16.msra.mxu0 0
    %1032 = vmatprep.subr.bf16.mxu0 0
    %1033 = vmatpush1.bf16.msra.mxu0 0
    %1034 = vmatprep.subr.bf16.mxu0 0
    %1035 = vmatpush1.bf16.msra.mxu0 0
    %1036 = vmatprep.subr.bf16.mxu0 0
    %1037 = vmatpush1.bf16.msra.mxu0 0
    %1038 = vmatprep.mubr.bf16.mxu0 0
    %1039 = vmatmul.mubr.bf16.gmra.mrb[0].mxu0 %v791
    %v1040 = vpop.f32.mrb[0].mxu0
    %v1041 = vadd.f32 %v829, %v1040
    %v1042 = vpop.f32.mrb[0].mxu0
    %v1043 = vadd.f32 %v833, %v1042
    %v1044 = vpop.f32.mrb[0].mxu0
    %v1045 = vpop.f32.mrb[0].mxu0
    %1046 = vdwg.mxu0
    %1047 = vmatprep.subr.bf16.mxu0 %v945
    %1048 = vmatpush1.bf16.msra.mxu0 %v944
    %1049 = vmatprep.subr.bf16.mxu0 %v949
    %1050 = vmatpush1.bf16.msra.mxu0 %v948
    %1051 = vmatprep.subr.bf16.mxu0 %v953
    %1052 = vmatpush1.bf16.msra.mxu0 %v952
    %1053 = vmatprep.subr.bf16.mxu0 %v957
    %1054 = vmatpush1.bf16.msra.mxu0 %v956
    %1055 = vmatprep.subr.bf16.mxu0 %v961
    %1056 = vmatpush1.bf16.msra.mxu0 %v960
    %1057 = vmatprep.subr.bf16.mxu0 %v965
    %1058 = vmatpush1.bf16.msra.mxu0 %v964
    %1059 = vmatprep.subr.bf16.mxu0 %v969
    %1060 = vmatpush1.bf16.msra.mxu0 %v968
    %1061 = vmatprep.subr.bf16.mxu0 %v973
    %1062 = vmatpush1.bf16.msra.mxu0 %v972
    %1063 = vmatprep.subr.bf16.mxu0 0
    %1064 = vmatpush1.bf16.msra.mxu0 0
    %1065 = vmatprep.subr.bf16.mxu0 0
    %1066 = vmatpush1.bf16.msra.mxu0 0
    %1067 = vmatprep.subr.bf16.mxu0 0
    %1068 = vmatpush1.bf16.msra.mxu0 0
    %1069 = vmatprep.subr.bf16.mxu0 0
    %1070 = vmatpush1.bf16.msra.mxu0 0
    %1071 = vmatprep.subr.bf16.mxu0 0
    %1072 = vmatpush1.bf16.msra.mxu0 0
    %1073 = vmatprep.subr.bf16.mxu0 0
    %1074 = vmatpush1.bf16.msra.mxu0 0
    %1075 = vmatprep.subr.bf16.mxu0 0
    %1076 = vmatpush1.bf16.msra.mxu0 0
    %1077 = vmatprep.subr.bf16.mxu0 0
    %1078 = vmatpush1.bf16.msra.mxu0 0
    %1079 = vmatprep.mubr.bf16.mxu0 0
    %1080 = vmatmul.mubr.bf16.gmra.mrb[0].mxu0 %v791
    %v1081 = vpop.f32.mrb[0].mxu0
    %v1082 = vadd.f32 %v837, %v1081
    %v1083 = vpop.f32.mrb[0].mxu0
    %v1084 = vadd.f32 %v841, %v1083
    %v1085 = vpop.f32.mrb[0].mxu0
    %v1086 = vpop.f32.mrb[0].mxu0
    %1087 = vdwg.mxu0
    %v1088 = vmax.f32 %v1041, 0.0
    %v1089 = vmax.f32 %v1043, 0.0
    %v1090 = vmax.f32 %v1082, 0.0
    %v1091 = vmax.f32 %v1084, 0.0
    %v1092 = vld [vmem:[%s5] sm:$0xf]
    %v1094 = vlaneseq
    %v1095 = vshrl.u32 %v1094, 7
    %v1096 = vsub.s32 0, %v1095
    %v1097 = vrot.slane %v1092, %v1096
    %v1098 = vlaneseq
    %v1099 = vshrl.u32 %v1098, 7
    %v1100 = vsub.s32 1, %v1099
    %v1101 = vrot.slane %v1092, %v1100
    %v1102 = vlaneseq
    %v1103 = vshrl.u32 %v1102, 7
    %v1104 = vsub.s32 2, %v1103
    %v1105 = vrot.slane %v1092, %v1104
    %v1106 = vlaneseq
    %v1107 = vshrl.u32 %v1106, 7
    %v1108 = vsub.s32 3, %v1107
    %v1109 = vrot.slane %v1092, %v1108
    %v1114 = vmul.f32 %v1088, %v1097
    %v1115 = vmul.f32 %v1089, %v1101
    %v1116 = vmul.f32 %v1090, %v1105
    %v1117 = vmul.f32 %v1091, %v1109
    %vm1118 = vcmask 1041408
    %v1119 = vsel %vm1118, %v1114, 0.0
    %v1120 = vsel %vm1118, %v1115, 0.0
    %v1121 = vadd.f32 %v1119, %v1120
    %v1122 = vsel %vm1118, %v1116, 0.0
    %v1123 = vadd.f32 %v1121, %v1122
    %v1124 = vsel %vm1118, %v1117, 0.0
    %v1125 = vadd.f32 %v1123, %v1124
    %1126 = vadd.xlane.f32.xlu0 %v1125
    %v1127 = vpop.xlane.xlu0 %1126
    %v1128 = vld [vmem:[#allocation2] sm:$0x1]
    %v1130 = vlaneseq
    %v1131 = vshrl.u32 %v1130, 7
    %v1132 = vsub.s32 0, %v1131
    %v1133 = vrot.slane %v1128, %v1132
    %v1135 = vadd.f32 %v1127, %v1133
    %vm1136 = vcmask 1024
    %1137 = vst.msk [vmem:[%s7] sm:$0x3] %vm1136, %v1135
    // Predicated region
    $region38: #{critic_forward.1} parent=1 // pred_check
      _
    $region39: #{critic_forward.1} parent=1 // pred_check_branch
      %1139 = sbr.rel (0) target = $region41
    $region40: #{critic_forward.1} parent=1 // pred_region
      _
    $region41: #{critic_forward.1} parent=1 // pred_fallthru
      _
    // Predicated region
    $region42: #{critic_forward.1} parent=1 // pred_check
      _
    $region43: #{critic_forward.1} parent=1 // pred_check_branch
      %1141 = sbr.rel (0) target = $region45
    $region44: #{critic_forward.1} parent=1 // pred_region
      _
    $region45: #{critic_forward.1} parent=1 // pred_fallthru
      _
    %1142 = vsyncpa [#allocation4], 1
    %1143 = vsyncpa [#allocation6], 1

</llo_original>
